<compile_context>
chip_gen: v7x
topology: tpu7x:2x2x1
jax: 0.10.0
libtpu: 0.0.40
codegen_flags: <defaults>
</compile_context>

<pallas_src>
import math

import jax
import jax.numpy as jnp
from jax.experimental import pallas as pl
from jax.experimental.pallas import tpu as pltpu


def _round_up(n, m):
    return ((n + m - 1) // m) * m


def _discriminator_kernel(x_ref, w1_ref, b1_ref, w2_ref, b2_ref, o_ref):
    # Layer 1: MXU matmul with f32 accumulation, bias + ReLU on the VPU.
    h = jnp.dot(x_ref[...], w1_ref[...], preferred_element_type=jnp.float32)
    h = jnp.maximum(h + b1_ref[...], 0.0)                        # (TB, H)
    # Layer 2 (H -> 1): VPU multiply + lane reduce (avoids N=1 MXU push/pop).
    z = jnp.sum(h * w2_ref[...], axis=-1)                        # (TB,)
    # Lane-dense store: (1, 1, TB) row for this batch tile.
    o_ref[...] = jax.nn.sigmoid(z[None, None, :] + b2_ref[...]).astype(o_ref.dtype)


def discriminator_forward(x, w1, b1, w2, b2, *, tb=256):
    """x: (B, input_size); w1: (input_size, H); b1: (1, H); w2: (H, 1); b2: (1, 1).

    Returns (B, 1), matching the PyTorch module (x @ W1 + b1 -> ReLU -> @ w2 + b2 -> sigmoid).
    """
    B, f_in = x.shape
    hidden = w1.shape[1]

    # Kernel-friendly parameter layouts (tiny; stay VMEM-resident across all tiles).
    b1_row = b1.reshape(1, hidden).astype(jnp.float32)
    w2_row = w2.reshape(1, hidden).astype(jnp.float32)   # (H, 1) -> (1, H)
    b2_s = b2.reshape(1, 1).astype(jnp.float32)

    # Batch tile: multiple of 8 sublanes; 256 rows fills the v6e/v7x MXU
    # (128 is enough on v5e). Small batches collapse to a single padded tile.
    tb = _round_up(max(8, min(tb, _round_up(B, 8))), 8)
    b_pad = _round_up(B, tb)
    if b_pad != B:
        x = jnp.pad(x, ((0, b_pad - B), (0, 0)))
    num_tiles = b_pad // tb

    out = pl.pallas_call(
        _discriminator_kernel,
        out_shape=jax.ShapeDtypeStruct((num_tiles, 1, tb), jnp.float32),
        grid=(num_tiles,),
        in_specs=[
            pl.BlockSpec((tb, f_in), lambda i: (i, 0)),      # x: tiled over batch
            pl.BlockSpec((f_in, hidden), lambda i: (0, 0)),  # W1: resident
            pl.BlockSpec((1, hidden), lambda i: (0, 0)),     # b1: resident
            pl.BlockSpec((1, hidden), lambda i: (0, 0)),     # w2 row: resident
            pl.BlockSpec((1, 1), lambda i: (0, 0)),          # b2: resident
        ],
        out_specs=pl.BlockSpec((1, 1, tb), lambda i: (i, 0, 0)),  # lane-dense slab
        compiler_params=pltpu.CompilerParams(
            dimension_semantics=("parallel",),               # megacore / 2-TC sharding
        ),
    )(x.astype(jnp.float32), w1.astype(jnp.float32), b1_row, w2_row, b2_s)

    # (num_tiles, 1, TB) lane-dense slab -> (B, 1) column, dropping batch padding.
    return out.reshape(b_pad, 1)[:B]


def _xavier_uniform(key, fan_in, fan_out, dtype=jnp.float32):
    # Matches nn.init.xavier_uniform_ (gain=1): U(-a, a), a = sqrt(6/(fan_in+fan_out))
    a = math.sqrt(6.0 / (fan_in + fan_out))
    return jax.random.uniform(key, (fan_in, fan_out), dtype=dtype, minval=-a, maxval=a)


def _reference(x, w1, b1, w2, b2):
    return jax.nn.sigmoid(jnp.maximum(x @ w1 + b1, 0.0) @ w2 + b2)


if __name__ == "__main__":
    # Module hyperparameters (kwargs of the PyTorch Discriminator)
    input_size = 32
    data_size = 1024
    hidden = math.ceil(math.sqrt(data_size))  # 32
    batch = 8

    key = jax.random.PRNGKey(0)
    k_x, k_w1, k_w2, k_x2 = jax.random.split(key, 4)

    # Deterministic parameters (xavier_uniform weights, bias = 0.01, per init_weights)
    x = jax.random.normal(k_x, (batch, input_size), dtype=jnp.float32)
    w1 = _xavier_uniform(k_w1, input_size, hidden)
    b1 = jnp.full((1, hidden), 0.01, dtype=jnp.float32)
    w2 = _xavier_uniform(k_w2, hidden, 1)
    b2 = jnp.full((1, 1), 0.01, dtype=jnp.float32)

    # Small-batch path (single padded tile).
    out = discriminator_forward(x, w1, b1, w2, b2)
    jax.block_until_ready(out)
    ref = _reference(x, w1, b1, w2, b2)
    assert out.shape == (batch, 1)
    assert jnp.allclose(out, ref, atol=1e-5, rtol=1e-5), "mismatch vs reference (small batch)"

    # Multi-tile path: batch not a multiple of the tile -> padding + 4 grid steps.
    batch2 = 200
    x2 = jax.random.normal(k_x2, (batch2, input_size), dtype=jnp.float32)
    out2 = discriminator_forward(x2, w1, b1, w2, b2, tb=64)
    jax.block_until_ready(out2)
    ref2 = _reference(x2, w1, b1, w2, b2)
    assert out2.shape == (batch2, 1)
    assert jnp.allclose(out2, ref2, atol=1e-5, rtol=1e-5), "mismatch vs reference (tiled batch)"

    print("KERNEL_OK")
</pallas_src>

<mosaic_0001>
module attributes {stable_mosaic.version = 11 : i64} {
  func.func @_discriminator_kernel(%arg0: i32, %arg1: memref<8x32xf32, #tpu.memory_space<vmem>>, %arg2: memref<32x32xf32, #tpu.memory_space<vmem>>, %arg3: memref<1x32xf32, #tpu.memory_space<vmem>>, %arg4: memref<1x32xf32, #tpu.memory_space<vmem>>, %arg5: memref<1x1xf32, #tpu.memory_space<vmem>>, %arg6: memref<1x1x8xf32, #tpu.memory_space<vmem>>) attributes {dimension_semantics = [#tpu.dimension_semantics<parallel>], iteration_bounds = array<i64: 1>, scalar_prefetch = 0 : i64, scratch_operands = 0 : i64, tpu.core_type = #tpu.core_type<tc>, window_params = [{transform_indices = @transform_0, window_bounds = array<i64: 8, 32>}, {pipeline_mode = #tpu.pipeline_mode<synchronous>, transform_indices = @transform_1, window_bounds = array<i64: 32, 32>}, {pipeline_mode = #tpu.pipeline_mode<synchronous>, transform_indices = @transform_2, window_bounds = array<i64: 1, 32>}, {pipeline_mode = #tpu.pipeline_mode<synchronous>, transform_indices = @transform_3, window_bounds = array<i64: 1, 32>}, {pipeline_mode = #tpu.pipeline_mode<synchronous>, transform_indices = @transform_4, window_bounds = array<i64: 1, 1>}, {transform_indices = @transform_5, window_bounds = array<i64: 1, 1, 8>}]} {
    %c0 = arith.constant 0 : index
    %c0_0 = arith.constant 0 : index
    %0 = vector.load %arg1[%c0, %c0_0] : memref<8x32xf32, #tpu.memory_space<vmem>>, vector<8x32xf32>
    %c0_1 = arith.constant 0 : index
    %c0_2 = arith.constant 0 : index
    %1 = vector.load %arg2[%c0_1, %c0_2] : memref<32x32xf32, #tpu.memory_space<vmem>>, vector<32x32xf32>
    %cst = arith.constant dense<0.000000e+00> : vector<8x32xf32>
    %2 = tpu.matmul %0, %1, %cst {dimension_numbers = #tpu.dot_dimension_numbers<[1], [0], [0], [1], [0, 0, 1, 1], [], []>} : vector<8x32xf32>, vector<32x32xf32>, vector<8x32xf32> -> vector<8x32xf32>
    %c0_3 = arith.constant 0 : index
    %c0_4 = arith.constant 0 : index
    %3 = vector.load %arg3[%c0_3, %c0_4] : memref<1x32xf32, #tpu.memory_space<vmem>>, vector<1x32xf32>
    %4 = vector.broadcast %3 : vector<1x32xf32> to vector<8x32xf32>
    %5 = arith.addf %2, %4 : vector<8x32xf32>
    %cst_5 = arith.constant 0.000000e+00 : f32
    %6 = vector.broadcast %cst_5 : f32 to vector<8x32xf32>
    %7 = arith.maximumf %5, %6 : vector<8x32xf32>
    %c0_6 = arith.constant 0 : index
    %c0_7 = arith.constant 0 : index
    %8 = vector.load %arg4[%c0_6, %c0_7] : memref<1x32xf32, #tpu.memory_space<vmem>>, vector<1x32xf32>
    %9 = vector.broadcast %8 : vector<1x32xf32> to vector<8x32xf32>
    %10 = arith.mulf %7, %9 : vector<8x32xf32>
    %cst_8 = arith.constant dense<0.000000e+00> : vector<8xf32>
    %11 = vector.multi_reduction <add>, %10, %cst_8 [1] : vector<8x32xf32> to vector<8xf32>
    %12 = vector.shape_cast %11 : vector<8xf32> to vector<1x1x8xf32>
    %c0_9 = arith.constant 0 : index
    %c0_10 = arith.constant 0 : index
    %13 = vector.load %arg5[%c0_9, %c0_10] : memref<1x1xf32, #tpu.memory_space<vmem>>, vector<1x1xf32>
    %14 = vector.shape_cast %13 : vector<1x1xf32> to vector<1x1x1xf32>
    %15 = vector.broadcast %14 : vector<1x1x1xf32> to vector<1x1x8xf32>
    %16 = arith.addf %12, %15 : vector<1x1x8xf32>
    %17 = arith.negf %16 : vector<1x1x8xf32>
    %18 = math.exp %17 : vector<1x1x8xf32>
    %cst_11 = arith.constant 1.000000e+00 : f32
    %19 = vector.broadcast %cst_11 : f32 to vector<1x1x8xf32>
    %20 = arith.addf %19, %18 : vector<1x1x8xf32>
    %21 = arith.divf %19, %20 : vector<1x1x8xf32>
    %c0_12 = arith.constant 0 : index
    %c0_13 = arith.constant 0 : index
    %c0_14 = arith.constant 0 : index
    %22 = vector.load %arg6[%c0_12, %c0_13, %c0_14] : memref<1x1x8xf32, #tpu.memory_space<vmem>>, vector<1x1x8xf32>
    tpu.vector_store %arg6[%c0_12, %c0_13, %c0_14], %21 {strides = array<i32>} : memref<1x1x8xf32, #tpu.memory_space<vmem>>, vector<1x1x8xf32>,
    return
  }
  func.func @transform_0(%arg0: i32) -> (i32, i32) {
    %c0_i32 = arith.constant 0 : i32
    %c0_i32_0 = arith.constant 0 : i32
    return %arg0, %c0_i32 : i32, i32
  }
  func.func @transform_1(%arg0: i32) -> (i32, i32) {
    %c0_i32 = arith.constant 0 : i32
    %c0_i32_0 = arith.constant 0 : i32
    %c0_i32_1 = arith.constant 0 : i32
    return %c0_i32, %c0_i32_0 : i32, i32
  }
  func.func @transform_2(%arg0: i32) -> (i32, i32) {
    %c0_i32 = arith.constant 0 : i32
    %c0_i32_0 = arith.constant 0 : i32
    %c0_i32_1 = arith.constant 0 : i32
    return %c0_i32, %c0_i32_0 : i32, i32
  }
  func.func @transform_3(%arg0: i32) -> (i32, i32) {
    %c0_i32 = arith.constant 0 : i32
    %c0_i32_0 = arith.constant 0 : i32
    %c0_i32_1 = arith.constant 0 : i32
    return %c0_i32, %c0_i32_0 : i32, i32
  }
  func.func @transform_4(%arg0: i32) -> (i32, i32) {
    %c0_i32 = arith.constant 0 : i32
    %c0_i32_0 = arith.constant 0 : i32
    %c0_i32_1 = arith.constant 0 : i32
    return %c0_i32, %c0_i32_0 : i32, i32
  }
  func.func @transform_5(%arg0: i32) -> (i32, i32, i32) {
    %c0_i32 = arith.constant 0 : i32
    %c0_i32_0 = arith.constant 0 : i32
    %c0_i32_1 = arith.constant 0 : i32
    return %arg0, %c0_i32, %c0_i32_0 : i32, i32, i32
  }
}

</mosaic_0001>

<llo_original>
// kernel: tpu_custom_call.1
$region0: #{tpu_custom_call.1}
  #allocation0 [shape = 'u32[]', space=smem, size = 0x4, offset = 0x4, fixed_abs, tag = 'smem constant byte address 0x4 - core index']
  #allocation1 [shape = 'u32[144,128]{1,0:T(1,128)}', space=vmem, size = 0x12000, scoped, tag = 'internal scratch']
  #allocation2 [shape = 'f32[1,1]{1,0:T(1,128)S(1)}', space=vmem, size = 0x200, scoped, tag = 'scoped memory for tpu_custom_call.1']
  %s0 = inlined_call_operand.hbm [shape: f32[8,32], index: 0, kind: input, shape index: {}]
  %s1 = inlined_call_operand.hbm [shape: f32[32,32], index: 1, kind: input, shape index: {}]
  %s2 = inlined_call_operand.vmem [shape: f32[1,32], index: 2, kind: input, shape index: {}]
  %s3 = inlined_call_operand.vmem [shape: f32[1,32], index: 3, kind: input, shape index: {}]
  %s4 = inlined_call_operand.<no memory space> [shape: f32[1,1], index: 4, kind: input, shape index: {}]
  %s5 = inlined_call_operand.hbm [shape: f32[1,1,8], index: 5, kind: output, shape index: {}]
  %s6 = sld [smem:[#allocation0]]
  $region38: #{tpu_custom_call.1} parent=0
    _
  %s8 = ssub.s32 1, %s6
  %s9 = scalar_select 0, %s8, %s6
  %v10 = vstv %s4
  %11 = vst [vmem:[#allocation2] sm:$0x1] %v10
  $region1: #{tpu_custom_call.1} parent=0
    #allocation3 [shape = 'u8[4096]{0}', space=vmem, size = 0x1000, scoped, tag = 'input window, operand 0, single buffered']
    #allocation4 [shape = 's32[1]{0}', space=sflag, size = 0x4, scoped, tag = 'scoped memory for tpu_custom_call.1']
    #allocation5 [shape = 's32[1]{0}', space=sflag, size = 0x4, scoped, tag = 'scoped memory for tpu_custom_call.1']
    #allocation6 [shape = 'u8[16384]{0}', space=vmem, size = 0x4000, scoped, tag = 'input window, operand 1, single buffered']
    #allocation7 [shape = 's32[1]{0}', space=sflag, size = 0x4, scoped, tag = 'scoped memory for tpu_custom_call.1']
    #allocation8 [shape = 'u8[512]{0}', space=vmem, size = 0x400, scoped, tag = 'output window, operand 0, single buffered']
    %12 = vsyncpa [#allocation4], 0
    %13 = vsyncpa [#allocation7], 0
    %14 = vsyncpa [#allocation5], 0
    // Predicated region
    $region2: #{tpu_custom_call.1} parent=1 // pred_check
      _
    $region3: #{tpu_custom_call.1} parent=1 // pred_check_branch
      %16 = sbr.rel (0) target = $region5
    $region4: #{tpu_custom_call.1} parent=1 // pred_region
      %s18 = ssub.s32 128, 128
      %19 = vsyncadd [#allocation4], %s18
      %s21 = sshll.u32 [#allocation3], 4
      %s22 = int_to_ptr.vmem [resolvable:$true] %s21
      %24 = dma.hbm_to_vmem [thread:$0]  %s0, 128, %s22, [#allocation4]
    $region5: #{tpu_custom_call.1} parent=1 // pred_fallthru
      _
    // Predicated region
    $region6: #{tpu_custom_call.1} parent=1 // pred_check
      _
    $region7: #{tpu_custom_call.1} parent=1 // pred_check_branch
      %26 = sbr.rel (0) target = $region9
    $region8: #{tpu_custom_call.1} parent=1 // pred_region
      %s28 = ssub.s32 512, 512
      %29 = vsyncadd [#allocation7], %s28
      %s30 = sshll.u32 [#allocation6], 4
      %s31 = int_to_ptr.vmem [resolvable:$true] %s30
      %36 = dma.hbm_to_vmem [thread:$0]  %s1, 512, %s31, [#allocation7], 128, 128, 8
    $region9: #{tpu_custom_call.1} parent=1 // pred_fallthru
      _
    // Predicated region
    $region10: #{tpu_custom_call.1} parent=1 // pred_check
      _
    $region11: #{tpu_custom_call.1} parent=1 // pred_check_branch
      %38 = sbr.rel (0) target = $region13
    $region12: #{tpu_custom_call.1} parent=1 // pred_region
      _
    $region13: #{tpu_custom_call.1} parent=1 // pred_fallthru
      _
    // Predicated region
    $region14: #{tpu_custom_call.1} parent=1 // pred_check
      _
    $region15: #{tpu_custom_call.1} parent=1 // pred_check_branch
      %40 = sbr.rel (0) target = $region17
    $region16: #{tpu_custom_call.1} parent=1 // pred_region
      _
    $region17: #{tpu_custom_call.1} parent=1 // pred_fallthru
      _
    // Predicated region
    $region18: #{tpu_custom_call.1} parent=1 // pred_check
      _
    $region19: #{tpu_custom_call.1} parent=1 // pred_check_branch
      %42 = sbr.rel (0) target = $region21
    $region20: #{tpu_custom_call.1} parent=1 // pred_region
      _
    $region21: #{tpu_custom_call.1} parent=1 // pred_fallthru
      _
    // Predicated region
    $region22: #{tpu_custom_call.1} parent=1 // pred_check
      _
    $region23: #{tpu_custom_call.1} parent=1 // pred_check_branch
      %44 = sbr.rel (0) target = $region25
    $region24: #{tpu_custom_call.1} parent=1 // pred_region
      %45 = dma.done [#allocation4], 128
    $region25: #{tpu_custom_call.1} parent=1 // pred_fallthru
      _
    // Predicated region
    $region26: #{tpu_custom_call.1} parent=1 // pred_check
      _
    $region27: #{tpu_custom_call.1} parent=1 // pred_check_branch
      %47 = sbr.rel (0) target = $region29
    $region28: #{tpu_custom_call.1} parent=1 // pred_region
      %48 = dma.done [#allocation7], 512
    $region29: #{tpu_custom_call.1} parent=1 // pred_fallthru
      _
    %v49 = vld [vmem:[#allocation3] sm:$0xff]
    %v50 = vld [vmem:[#allocation6] sm:$0xff]
    %v51 = vld [vmem:[#allocation6 + $0x8] sm:$0xff]
    %v52 = vld [vmem:[#allocation6 + $0x10] sm:$0xff]
    %v53 = vld [vmem:[#allocation6 + $0x18] sm:$0xff]
    %v54 = vld [vmem:[%s2] sm:$0x1]
    %v56 = vlaneseq
    %v57 = vshrl.u32 %v56, 7
    %v58 = vsub.s32 0, %v57
    %v59 = vrot.slane %v54, %v58
    %vm61 = vcmask 261120
    %v63 = vsel %vm61, %v49, 0
    %65 = vmatprep.subr.mxu0 0.0
    %66 = vmatpush1.msra.mxu0 %v50
    %67 = vmatprep.subr.mxu0 0.0
    %68 = vmatpush1.msra.mxu0 %v51
    %69 = vmatprep.subr.mxu0 0.0
    %70 = vmatpush1.msra.mxu0 %v52
    %71 = vmatprep.subr.mxu0 0.0
    %72 = vmatpush1.msra.mxu0 %v53
    %73 = vmatprep.subr.mxu0 0.0
    %74 = vmatpush1.msra.mxu0 0.0
    %75 = vmatprep.subr.mxu0 0.0
    %76 = vmatpush1.msra.mxu0 0.0
    %77 = vmatprep.subr.mxu0 0.0
    %78 = vmatpush1.msra.mxu0 0.0
    %79 = vmatprep.subr.mxu0 0.0
    %80 = vmatpush1.msra.mxu0 0.0
    %81 = vmatprep.subr.mxu0 0.0
    %82 = vmatpush1.msra.mxu0 0.0
    %83 = vmatprep.subr.mxu0 0.0
    %84 = vmatpush1.msra.mxu0 0.0
    %85 = vmatprep.subr.mxu0 0.0
    %86 = vmatpush1.msra.mxu0 0.0
    %87 = vmatprep.subr.mxu0 0.0
    %88 = vmatpush1.msra.mxu0 0.0
    %89 = vmatprep.subr.mxu0 0.0
    %90 = vmatpush1.msra.mxu0 0.0
    %91 = vmatprep.subr.mxu0 0.0
    %92 = vmatpush1.msra.mxu0 0.0
    %93 = vmatprep.subr.mxu0 0.0
    %94 = vmatpush1.msra.mxu0 0.0
    %95 = vmatprep.subr.mxu0 0.0
    %96 = vmatpush1.msra.mxu0 0.0
    %97 = vmatprep.subr.mxu0 0.0
    %98 = vmatpush1.msra.mxu0 0.0
    %99 = vmatprep.subr.mxu0 0.0
    %100 = vmatpush1.msra.mxu0 0.0
    %101 = vmatprep.subr.mxu0 0.0
    %102 = vmatpush1.msra.mxu0 0.0
    %103 = vmatprep.subr.mxu0 0.0
    %104 = vmatpush1.msra.mxu0 0.0
    %105 = vmatprep.subr.mxu0 0.0
    %106 = vmatpush1.msra.mxu0 0.0
    %107 = vmatprep.subr.mxu0 0.0
    %108 = vmatpush1.msra.mxu0 0.0
    %109 = vmatprep.subr.mxu0 0.0
    %110 = vmatpush1.msra.mxu0 0.0
    %111 = vmatprep.subr.mxu0 0.0
    %112 = vmatpush1.msra.mxu0 0.0
    %113 = vmatprep.subr.mxu0 0.0
    %114 = vmatpush1.msra.mxu0 0.0
    %115 = vmatprep.subr.mxu0 0.0
    %116 = vmatpush1.msra.mxu0 0.0
    %117 = vmatprep.subr.mxu0 0.0
    %118 = vmatpush1.msra.mxu0 0.0
    %119 = vmatprep.subr.mxu0 0.0
    %120 = vmatpush1.msra.mxu0 0.0
    %121 = vmatprep.subr.mxu0 0.0
    %122 = vmatpush1.msra.mxu0 0.0
    %123 = vmatprep.subr.mxu0 0.0
    %124 = vmatpush1.msra.mxu0 0.0
    %125 = vmatprep.subr.mxu0 0.0
    %126 = vmatpush1.msra.mxu0 0.0
    %127 = vmatprep.subr.mxu0 0.0
    %128 = vmatpush1.msra.mxu0 0.0
    %129 = vmatprep.mubr.f32.mxu0 0.0
    %130 = vmatmul.mubr.f32.gmra.mrb[0].mxu0 %v63
    %v131 = vpop.f32.mrb[0].mxu0
    %v132 = vadd.f32 %v59, %v131
    %v133 = vpop.f32.mrb[0].mxu0
    %134 = vdwg.mxu0
    %v135 = vmax.f32 %v132, 0.0
    %v136 = vld [vmem:[%s3] sm:$0x1]
    %v138 = vlaneseq
    %v139 = vshrl.u32 %v138, 7
    %v140 = vsub.s32 0, %v139
    %v141 = vrot.slane %v136, %v140
    %v143 = vmul.f32 %v135, %v141
    %v144 = vsel %vm61, %v143, 0.0
    %145 = vadd.xlane.f32.xlu0 %v144
    %v146 = vpop.xlane.xlu0 %145
    %v147 = vld [vmem:[#allocation2] sm:$0x1]
    %149 = vset.pattern.permute.xlu0 0
    %150 = vperm.xlu0 %149, %v147
    %v151 = vpop.permute.xlu0 %150
    %v153 = vlaneseq
    %v154 = vshrl.u32 %v153, 7
    %v155 = vsub.s32 0, %v154
    %v156 = vrot.slane %v151, %v155
    %v157 = vadd.f32 %v146, %v156
    %v158 = vxor.u32 %v157, 2147483648
    %v159 = vmul.f32 %v158, 1.442695
    %v160 = vpow.pop %v159
    %v161 = vadd.f32 %v160, 1.0
    %v162 = vrcp.pop %v161
    %v163 = vmul.f32 1.0, %v162
    %v165 = vlaneseq
    %v166 = vand.u32 %v165, 127
    %v167 = vlaneseq
    %v168 = vshrl.u32 %v167, 7
    %v169 = vsub.s32 %v166, %v168
    %v170 = vrot.slane %v163, %v169
    %vm172 = vcmask 57344
    %173 = vst.msk [vmem:[#allocation8] sm:$0x1] %vm172, %v170
    // Predicated region
    $region30: #{tpu_custom_call.1} parent=1 // pred_check
      _
    $region31: #{tpu_custom_call.1} parent=1 // pred_check_branch
      %175 = sbr.rel (0) target = $region33
    $region32: #{tpu_custom_call.1} parent=1 // pred_region
      %s177 = ssub.s32 16, 16
      %178 = vsyncadd [#allocation5], %s177
      %s180 = sshll.u32 [#allocation8], 4
      %s181 = int_to_ptr.vmem [resolvable:$true] %s180
      %183 = dma.vmem_to_hbm [thread:$0]  %s181, 16, %s5, [#allocation5]
    $region33: #{tpu_custom_call.1} parent=1 // pred_fallthru
      _
    // Predicated region
    $region34: #{tpu_custom_call.1} parent=1 // pred_check
      _
    $region35: #{tpu_custom_call.1} parent=1 // pred_check_branch
      %185 = sbr.rel (0) target = $region37
    $region36: #{tpu_custom_call.1} parent=1 // pred_region
      %186 = dma.done [#allocation5], 16
    $region37: #{tpu_custom_call.1} parent=1 // pred_fallthru
      _
    %187 = vsyncpa [#allocation4], 1
    %188 = vsyncpa [#allocation7], 1
    %189 = vsyncpa [#allocation5], 1

</llo_original>
